<compile_context>
chip_gen: v6e
topology: v6e:2x2x1
jax: 0.10.0
libtpu: 0.0.40
codegen_flags: <defaults>
</compile_context>

<pallas_src>
import functools

import jax
import jax.numpy as jnp
from jax import lax
from jax.experimental import pallas as pl
from jax.experimental.pallas import tpu as pltpu


def _dwconv3x3_kernel(idx_ref, x_ref, w_ref, b_ref, o_ref, *, H, W):
    # idx_ref: (2, L) int32   row 0 = h index, row 1 = w index of each flat pos
    # x_ref  : (Cb, L)        Cb channels of one batch element, flattened H*W
    # w_ref  : (Cb, 9) f32    per-channel 3x3 taps, flat index kh*3 + kw
    # b_ref  : (Cb, 1) f32    per-channel bias
    # o_ref  : (Cb, L)        output block
    Cb, L = o_ref.shape

    # Hoist all loads before the vector loop.
    x = x_ref[...].astype(jnp.float32)
    wv = w_ref[...]                                   # (Cb, 9)
    bv = b_ref[...]                                   # (Cb, 1)

    row = jnp.broadcast_to(idx_ref[0:1, :], (Cb, L))  # output h per position
    col = jnp.broadcast_to(idx_ref[1:2, :], (Cb, L))  # output w per position

    # Output-frame validity masks for each spatial offset (hoisted, reused).
    m_h = {-1: row >= 1, 1: row <= H - 2}
    m_w = {-1: col >= 1, 1: col <= W - 2}

    # h-shifted (and h-masked) variants; lane shifts go to the XLU via roll.
    # x_h[dh][l] == x[l + dh*W] where the output row is valid, else 0.
    x_h = {0: x}
    for dh in (-1, 1):
        y = pltpu.roll(x, shift=(-dh * W) % L, axis=1)
        x_h[dh] = jnp.where(m_h[dh], y, 0.0)

    # Accumulate in f32, seeded with the per-channel bias.
    acc = jnp.broadcast_to(bv, (Cb, L))
    for kh in range(3):
        dh = kh - 1
        xh = x_h[dh]
        for kw in range(3):
            dw = kw - 1
            if dw == 0:
                xs = xh
            else:
                z = pltpu.roll(xh, shift=(-dw) % L, axis=1)
                xs = jnp.where(m_w[dw], z, 0.0)
            k = kh * 3 + kw
            tap = wv[:, k:k + 1]                      # (Cb, 1) per-channel tap
            acc = acc + xs * tap

    # Single full-tile, lane-dense store; cast once.
    o_ref[...] = acc.astype(o_ref.dtype)


def dwconv_pallas(x_nchw, weight_oihw, bias):
    """Depthwise 3x3 conv2d, PyTorch semantics (stride=1, padding=1, groups=C).

    x_nchw     : (B, C, H, W)
    weight_oihw: (C, 1, 3, 3)
    bias       : (C,)
    returns    : (B, C, H, W)
    """
    B, C, H, W = x_nchw.shape
    L = H * W
    dtype = x_nchw.dtype
    itemsize = jnp.dtype(dtype).itemsize

    # Contiguous reshapes only (no extra HBM passes).
    x_flat = x_nchw.reshape(B, C, L)
    w2 = weight_oihw.astype(jnp.float32).reshape(C, 9)   # idx = kh*3 + kw
    b2 = bias.astype(jnp.float32).reshape(C, 1)

    # Tiny row/col index table so the kernel needs no vector div/mod.
    hw = jnp.arange(L, dtype=jnp.int32)
    idx = jnp.stack([hw // W, hw % W], axis=0)            # (2, L)

    # Channel block: whole C when small, else a multiple of 8 that divides C,
    # keeping the per-step input block <= ~2 MiB (v7x-friendly VMEM budget).
    target_bytes = 2 << 20
    cblk = C
    while cblk % 2 == 0 and (cblk // 2) % 8 == 0 and cblk * L * itemsize > target_bytes:
        cblk //= 2
    grid = (B, C // cblk)

    cost = pl.CostEstimate(
        flops=2 * 9 * B * C * H * W,
        transcendentals=0,
        bytes_accessed=(2 * B * C * L * itemsize
                        + w2.size * 4 + b2.size * 4 + idx.size * 4),
    )

    kernel = functools.partial(_dwconv3x3_kernel, H=H, W=W)

    out = pl.pallas_call(
        kernel,
        out_shape=jax.ShapeDtypeStruct((B, C, L), dtype),
        grid_spec=pltpu.PrefetchScalarGridSpec(
            num_scalar_prefetch=0,
            grid=grid,
            in_specs=[
                pl.BlockSpec((2, L), lambda b, cb: (0, 0)),               # idx
                pl.BlockSpec((None, cblk, L), lambda b, cb: (b, cb, 0)),  # x
                pl.BlockSpec((cblk, 9), lambda b, cb: (cb, 0)),           # taps
                pl.BlockSpec((cblk, 1), lambda b, cb: (cb, 0)),           # bias
            ],
            out_specs=pl.BlockSpec((None, cblk, L), lambda b, cb: (b, cb, 0)),
        ),
        compiler_params=pltpu.CompilerParams(
            dimension_semantics=("parallel", "parallel")),
        cost_estimate=cost,
    )(idx, x_flat, w2, b2)

    return out.reshape(B, C, H, W)


if __name__ == "__main__":
    key = jax.random.PRNGKey(0)
    k_x, k_w, k_b = jax.random.split(key, 3)

    B, C, H, W = 2, 4, 16, 16   # small shapes consistent with DWConv(dim=4)

    x = jax.random.normal(k_x, (B, C, H, W), dtype=jnp.float32)
    # parameter shapes match nn.Conv2d(C, C, 3, 1, 1, bias=True, groups=C)
    weight = jax.random.normal(k_w, (C, 1, 3, 3), dtype=jnp.float32) * 0.1
    bias = jax.random.normal(k_b, (C,), dtype=jnp.float32) * 0.1

    out = dwconv_pallas(x, weight, bias)
    out = jax.block_until_ready(out)

    # reference: XLA depthwise conv with identical PyTorch semantics
    ref = lax.conv_general_dilated(
        x, weight, window_strides=(1, 1), padding=((1, 1), (1, 1)),
        dimension_numbers=("NCHW", "OIHW", "NCHW"),
        feature_group_count=C,
    ) + bias[None, :, None, None]

    assert out.shape == (B, C, H, W)
    assert jnp.allclose(out, ref, atol=1e-5, rtol=1e-5)

    print("KERNEL_OK")
</pallas_src>

<mosaic_0001>
module attributes {stable_mosaic.version = 11 : i64} {
  func.func @_dwconv3x3_kernel(%arg0: i32, %arg1: i32, %arg2: memref<2x256xi32, #tpu.memory_space<vmem>>, %arg3: memref<1x4x256xf32, #tpu.memory_space<vmem>>, %arg4: memref<4x9xf32, #tpu.memory_space<vmem>>, %arg5: memref<4x1xf32, #tpu.memory_space<vmem>>, %arg6: memref<1x4x256xf32, #tpu.memory_space<vmem>>) attributes {dimension_semantics = [#tpu.dimension_semantics<parallel>, #tpu.dimension_semantics<parallel>], iteration_bounds = array<i64: 2, 1>, scalar_prefetch = 0 : i64, scratch_operands = 0 : i64, tpu.core_type = #tpu.core_type<tc>, window_params = [{pipeline_mode = #tpu.pipeline_mode<synchronous>, transform_indices = @transform_0, window_bounds = array<i64: 2, 256>}, {transform_indices = @transform_1, window_bounds = array<i64: 1, 4, 256>}, {transform_indices = @transform_2, window_bounds = array<i64: 4, 9>}, {transform_indices = @transform_3, window_bounds = array<i64: 4, 1>}, {transform_indices = @transform_4, window_bounds = array<i64: 1, 4, 256>}]} {
    %c0 = arith.constant 0 : index
    %c0_0 = arith.constant 0 : index
    %c0_1 = arith.constant 0 : index
    %0 = vector.load %arg3[%c0, %c0_0, %c0_1] : memref<1x4x256xf32, #tpu.memory_space<vmem>>, vector<1x4x256xf32>
    %1 = vector.shape_cast %0 : vector<1x4x256xf32> to vector<4x256xf32>
    %c0_2 = arith.constant 0 : index
    %c0_3 = arith.constant 0 : index
    %2 = vector.load %arg4[%c0_2, %c0_3] : memref<4x9xf32, #tpu.memory_space<vmem>>, vector<4x9xf32>
    %c0_4 = arith.constant 0 : index
    %c0_5 = arith.constant 0 : index
    %3 = vector.load %arg5[%c0_4, %c0_5] : memref<4x1xf32, #tpu.memory_space<vmem>>, vector<4x1xf32>
    %c0_6 = arith.constant 0 : index
    %c0_7 = arith.constant 0 : index
    %4 = vector.load %arg2[%c0_6, %c0_7] : memref<2x256xi32, #tpu.memory_space<vmem>>, vector<1x256xi32>
    %5 = vector.shape_cast %4 : vector<1x256xi32> to vector<1x256xi32>
    %6 = vector.broadcast %5 : vector<1x256xi32> to vector<4x256xi32>
    %c1 = arith.constant 1 : index
    %c0_8 = arith.constant 0 : index
    %7 = vector.load %arg2[%c1, %c0_8] : memref<2x256xi32, #tpu.memory_space<vmem>>, vector<1x256xi32>
    %8 = vector.shape_cast %7 : vector<1x256xi32> to vector<1x256xi32>
    %9 = vector.broadcast %8 : vector<1x256xi32> to vector<4x256xi32>
    %c1_i32 = arith.constant 1 : i32
    %10 = vector.broadcast %c1_i32 : i32 to vector<4x256xi32>
    %11 = arith.cmpi sge, %6, %10 : vector<4x256xi32>
    %c14_i32 = arith.constant 14 : i32
    %12 = vector.broadcast %c14_i32 : i32 to vector<4x256xi32>
    %13 = arith.cmpi sle, %6, %12 : vector<4x256xi32>
    %c1_i32_9 = arith.constant 1 : i32
    %14 = vector.broadcast %c1_i32_9 : i32 to vector<4x256xi32>
    %15 = arith.cmpi sge, %9, %14 : vector<4x256xi32>
    %c14_i32_10 = arith.constant 14 : i32
    %16 = vector.broadcast %c14_i32_10 : i32 to vector<4x256xi32>
    %17 = arith.cmpi sle, %9, %16 : vector<4x256xi32>
    %c16_i32 = arith.constant 16 : i32
    %18 = tpu.dynamic_rotate %1 by %c16_i32 dim 1 : vector<4x256xf32>, i32 -> vector<4x256xf32>
    %cst = arith.constant 0.000000e+00 : f32
    %19 = vector.broadcast %cst : f32 to vector<4x256xf32>
    %20 = arith.select %11, %18, %19 : vector<4x256xi1>, vector<4x256xf32>
    %c240_i32 = arith.constant 240 : i32
    %21 = tpu.dynamic_rotate %1 by %c240_i32 dim 1 : vector<4x256xf32>, i32 -> vector<4x256xf32>
    %cst_11 = arith.constant 0.000000e+00 : f32
    %22 = vector.broadcast %cst_11 : f32 to vector<4x256xf32>
    %23 = arith.select %13, %21, %22 : vector<4x256xi1>, vector<4x256xf32>
    %24 = vector.shape_cast %3 : vector<4x1xf32> to vector<4x1xf32>
    %25 = vector.broadcast %24 : vector<4x1xf32> to vector<4x256xf32>
    %c1_i32_12 = arith.constant 1 : i32
    %26 = tpu.dynamic_rotate %20 by %c1_i32_12 dim 1 : vector<4x256xf32>, i32 -> vector<4x256xf32>
    %cst_13 = arith.constant 0.000000e+00 : f32
    %27 = vector.broadcast %cst_13 : f32 to vector<4x256xf32>
    %28 = arith.select %15, %26, %27 : vector<4x256xi1>, vector<4x256xf32>
    %29 = vector.extract_strided_slice %2 {offsets = [0, 0], sizes = [4, 1], strides = [1, 1]} : vector<4x9xf32> to vector<4x1xf32>
    %30 = vector.broadcast %29 : vector<4x1xf32> to vector<4x256xf32>
    %31 = arith.mulf %28, %30 : vector<4x256xf32>
    %32 = arith.addf %25, %31 : vector<4x256xf32>
    %33 = vector.extract_strided_slice %2 {offsets = [0, 1], sizes = [4, 1], strides = [1, 1]} : vector<4x9xf32> to vector<4x1xf32>
    %34 = vector.broadcast %33 : vector<4x1xf32> to vector<4x256xf32>
    %35 = arith.mulf %20, %34 : vector<4x256xf32>
    %36 = arith.addf %32, %35 : vector<4x256xf32>
    %c255_i32 = arith.constant 255 : i32
    %37 = tpu.dynamic_rotate %20 by %c255_i32 dim 1 : vector<4x256xf32>, i32 -> vector<4x256xf32>
    %cst_14 = arith.constant 0.000000e+00 : f32
    %38 = vector.broadcast %cst_14 : f32 to vector<4x256xf32>
    %39 = arith.select %17, %37, %38 : vector<4x256xi1>, vector<4x256xf32>
    %40 = vector.extract_strided_slice %2 {offsets = [0, 2], sizes = [4, 1], strides = [1, 1]} : vector<4x9xf32> to vector<4x1xf32>
    %41 = vector.broadcast %40 : vector<4x1xf32> to vector<4x256xf32>
    %42 = arith.mulf %39, %41 : vector<4x256xf32>
    %43 = arith.addf %36, %42 : vector<4x256xf32>
    %c1_i32_15 = arith.constant 1 : i32
    %44 = tpu.dynamic_rotate %1 by %c1_i32_15 dim 1 : vector<4x256xf32>, i32 -> vector<4x256xf32>
    %cst_16 = arith.constant 0.000000e+00 : f32
    %45 = vector.broadcast %cst_16 : f32 to vector<4x256xf32>
    %46 = arith.select %15, %44, %45 : vector<4x256xi1>, vector<4x256xf32>
    %47 = vector.extract_strided_slice %2 {offsets = [0, 3], sizes = [4, 1], strides = [1, 1]} : vector<4x9xf32> to vector<4x1xf32>
    %48 = vector.broadcast %47 : vector<4x1xf32> to vector<4x256xf32>
    %49 = arith.mulf %46, %48 : vector<4x256xf32>
    %50 = arith.addf %43, %49 : vector<4x256xf32>
    %51 = vector.extract_strided_slice %2 {offsets = [0, 4], sizes = [4, 1], strides = [1, 1]} : vector<4x9xf32> to vector<4x1xf32>
    %52 = vector.broadcast %51 : vector<4x1xf32> to vector<4x256xf32>
    %53 = arith.mulf %1, %52 : vector<4x256xf32>
    %54 = arith.addf %50, %53 : vector<4x256xf32>
    %c255_i32_17 = arith.constant 255 : i32
    %55 = tpu.dynamic_rotate %1 by %c255_i32_17 dim 1 : vector<4x256xf32>, i32 -> vector<4x256xf32>
    %cst_18 = arith.constant 0.000000e+00 : f32
    %56 = vector.broadcast %cst_18 : f32 to vector<4x256xf32>
    %57 = arith.select %17, %55, %56 : vector<4x256xi1>, vector<4x256xf32>
    %58 = vector.extract_strided_slice %2 {offsets = [0, 5], sizes = [4, 1], strides = [1, 1]} : vector<4x9xf32> to vector<4x1xf32>
    %59 = vector.broadcast %58 : vector<4x1xf32> to vector<4x256xf32>
    %60 = arith.mulf %57, %59 : vector<4x256xf32>
    %61 = arith.addf %54, %60 : vector<4x256xf32>
    %c1_i32_19 = arith.constant 1 : i32
    %62 = tpu.dynamic_rotate %23 by %c1_i32_19 dim 1 : vector<4x256xf32>, i32 -> vector<4x256xf32>
    %cst_20 = arith.constant 0.000000e+00 : f32
    %63 = vector.broadcast %cst_20 : f32 to vector<4x256xf32>
    %64 = arith.select %15, %62, %63 : vector<4x256xi1>, vector<4x256xf32>
    %65 = vector.extract_strided_slice %2 {offsets = [0, 6], sizes = [4, 1], strides = [1, 1]} : vector<4x9xf32> to vector<4x1xf32>
    %66 = vector.broadcast %65 : vector<4x1xf32> to vector<4x256xf32>
    %67 = arith.mulf %64, %66 : vector<4x256xf32>
    %68 = arith.addf %61, %67 : vector<4x256xf32>
    %69 = vector.extract_strided_slice %2 {offsets = [0, 7], sizes = [4, 1], strides = [1, 1]} : vector<4x9xf32> to vector<4x1xf32>
    %70 = vector.broadcast %69 : vector<4x1xf32> to vector<4x256xf32>
    %71 = arith.mulf %23, %70 : vector<4x256xf32>
    %72 = arith.addf %68, %71 : vector<4x256xf32>
    %c255_i32_21 = arith.constant 255 : i32
    %73 = tpu.dynamic_rotate %23 by %c255_i32_21 dim 1 : vector<4x256xf32>, i32 -> vector<4x256xf32>
    %cst_22 = arith.constant 0.000000e+00 : f32
    %74 = vector.broadcast %cst_22 : f32 to vector<4x256xf32>
    %75 = arith.select %17, %73, %74 : vector<4x256xi1>, vector<4x256xf32>
    %76 = vector.extract_strided_slice %2 {offsets = [0, 8], sizes = [4, 1], strides = [1, 1]} : vector<4x9xf32> to vector<4x1xf32>
    %77 = vector.broadcast %76 : vector<4x1xf32> to vector<4x256xf32>
    %78 = arith.mulf %75, %77 : vector<4x256xf32>
    %79 = arith.addf %72, %78 : vector<4x256xf32>
    %c0_23 = arith.constant 0 : index
    %c0_24 = arith.constant 0 : index
    %c0_25 = arith.constant 0 : index
    %80 = vector.load %arg6[%c0_23, %c0_24, %c0_25] : memref<1x4x256xf32, #tpu.memory_space<vmem>>, vector<1x4x256xf32>
    %81 = vector.shape_cast %80 : vector<1x4x256xf32> to vector<4x256xf32>
    %82 = vector.shape_cast %79 : vector<4x256xf32> to vector<1x4x256xf32>
    tpu.vector_store %arg6[%c0_23, %c0_24, %c0_25], %82 {strides = array<i32>} : memref<1x4x256xf32, #tpu.memory_space<vmem>>, vector<1x4x256xf32>,
    return
  }
  func.func @transform_0(%arg0: i32, %arg1: i32) -> (i32, i32) {
    %c0_i32 = arith.constant 0 : i32
    %c0_i32_0 = arith.constant 0 : i32
    %c0_i32_1 = arith.constant 0 : i32
    return %c0_i32, %c0_i32_0 : i32, i32
  }
  func.func @transform_1(%arg0: i32, %arg1: i32) -> (i32, i32, i32) {
    %c0_i32 = arith.constant 0 : i32
    %c0_i32_0 = arith.constant 0 : i32
    return %arg0, %arg1, %c0_i32 : i32, i32, i32
  }
  func.func @transform_2(%arg0: i32, %arg1: i32) -> (i32, i32) {
    %c0_i32 = arith.constant 0 : i32
    %c0_i32_0 = arith.constant 0 : i32
    return %arg1, %c0_i32 : i32, i32
  }
  func.func @transform_3(%arg0: i32, %arg1: i32) -> (i32, i32) {
    %c0_i32 = arith.constant 0 : i32
    %c0_i32_0 = arith.constant 0 : i32
    return %arg1, %c0_i32 : i32, i32
  }
  func.func @transform_4(%arg0: i32, %arg1: i32) -> (i32, i32, i32) {
    %c0_i32 = arith.constant 0 : i32
    %c0_i32_0 = arith.constant 0 : i32
    return %arg0, %arg1, %c0_i32 : i32, i32, i32
  }
}

</mosaic_0001>

<llo_original>
// kernel: tpu_custom_call.1
$region0: #{tpu_custom_call.1}
  #allocation0 [shape = 'u32[]', space=smem, size = 0x4, offset = 0x4, fixed_abs, tag = 'smem constant byte address 0x4 - core index']
  #allocation1 [shape = 'u32[144,128]{1,0:T(1,128)}', space=vmem, size = 0x12000, scoped, tag = 'internal scratch']
  %s0 = inlined_call_operand.vmem [shape: s32[2,256], index: 0, kind: input, shape index: {}]
  %s1 = inlined_call_operand.hbm [shape: f32[2,4,256], index: 1, kind: input, shape index: {}]
  %s2 = inlined_call_operand.vmem [shape: f32[4,9], index: 2, kind: input, shape index: {}]
  %s3 = inlined_call_operand.vmem [shape: f32[4,1], index: 3, kind: input, shape index: {}]
  %s4 = inlined_call_operand.hbm [shape: f32[2,4,256], index: 4, kind: output, shape index: {}]
  %s5 = sld [smem:[#allocation0]]
  $region53: #{tpu_custom_call.1} parent=0
    _
  %s7 = ssub.s32 1, %s5
  %s8 = scalar_select 0, %s7, %s5
  $region1: #{tpu_custom_call.1} parent=0
    #allocation2 [shape = 'u8[8192]{0}', space=vmem, size = 0x2000, scoped, tag = 'input window, operand 1']
    #allocation3 [shape = 's32[2]{0}', space=sflag, size = 0x8, scoped, tag = 'scoped memory for tpu_custom_call.1']
    #allocation4 [shape = 's32[2]{0}', space=sflag, size = 0x8, scoped, tag = 'scoped memory for tpu_custom_call.1']
    #allocation5 [shape = 'u8[8192]{0}', space=vmem, size = 0x2000, scoped, tag = 'output window, operand 0']
    %9 = vsyncpa [#allocation3], 0
    %s10 = scalar_lea.sflag [#allocation3], 1
    %11 = vsyncpa %s10, 0
    %12 = vsyncpa [#allocation4], 0
    %s13 = scalar_lea.sflag [#allocation4], 1
    %14 = vsyncpa %s13, 0
    loop: start=0, step=1, limit=4
    $region2: #{tpu_custom_call.1} parent=1 // loop_pre_header
      _
    $region3: #{tpu_custom_call.1} parent=1 // loop_header
      %s16 = sphi 0, %s20
      %p17 = scmp.ge.s32.totalorder %s16, 4
      %s23 = sphi 0, %s35
      %s24 = sphi 0, %s31
      %s25 = sphi 0, %s23
      %s26 = sphi 0, %s24
      %s27 = sphi 0, %s25
      %s28 = sphi 0, %s26
      %s36 = sphi 0, %s36
      %s38 = sphi 0, %s36
      %s39 = sphi 0, %s38
      %s53 = sphi 0, %s39
      %s61 = sphi 0, %s63
      %s64 = sphi 0, %s61
      %s65 = sphi 0, %s64
      %s81 = sphi 0, %s65
      %s87 = sphi 0, %s89
      %s90 = sphi 0, %s87
      %s91 = sphi 0, %s90
      %s107 = sphi 0, %s91
      %s113 = sphi 0, %s115
      %s116 = sphi 0, %s113
      %s117 = sphi 0, %s116
      %s133 = sphi 0, %s117
      %s141 = sphi 0, %s143
      %s144 = sphi 0, %s141
      %s145 = sphi 0, %s144
      %s161 = sphi 0, %s145
    $region4: #{tpu_custom_call.1} parent=1 // loop_header_branch
      %19 = sbr.rel (%p17) target = $region8
    $region5: #{tpu_custom_call.1} parent=1 // loop_body
      %s21 = ssub.s32 %s16, 1
      %s22 = ssub.s32 %s16, 2
      %s29 = sadd.s32 1, %s24
      %p30 = scmp.ge.s32.totalorder %s29, 1
      %s31 = scalar_select %p30, 0, %s29
      %s32 = sadd.s32 1, %s23
      %s33 = scalar_select %p30, %s32, %s23
      %p34 = scmp.ge.s32.totalorder %s33, 2
      %s35 = scalar_select %p34, 0, %s33
      %s37 = sadd.s32 %s36, 1
      %p40 = scmp.eq.s32.totalorder %s16, 1
      %p41 = scmp.ne.s32.totalorder %s36, %s38
      %p42 = scmp.eq.s32.totalorder %s16, 0
      %p43 = por %p41, %p42
      %p44 = scmp.ne.s32.totalorder %s36, %s38
      %p45 = scmp.eq.s32.totalorder %s21, 1
      %p46 = por %p44, %p45
      %p47 = scmp.ne.s32.totalorder %s38, %s39
      %p48 = scmp.eq.s32.totalorder %s21, 0
      %p49 = por %p47, %p48
      %p50 = scmp.ne.s32.totalorder %s38, %s39
      %p51 = scmp.eq.s32.totalorder %s22, 1
      %p52 = por %p50, %p51
      %p54 = scmp.ne.s32.totalorder %s39, %s53
      %p55 = scmp.eq.s32.totalorder %s22, 0
      %p56 = por %p54, %p55
      %s57 = ssub.s32 %s23, %s35
      %s58 = ssub.s32 %s24, %s31
      %s59 = sor.u32 %s57, %s58
      %p60 = scmp.eq.s32.totalorder %s59, 0
      %s62 = sadd.s32 %s61, 1
      %s63 = scalar_select %p60, %s61, %s62
      %p66 = pneg %p60
      %p67 = scmp.eq.s32.totalorder %s16, 1
      %p68 = por %p66, %p67
      %p69 = scmp.ne.s32.totalorder %s61, %s64
      %p70 = scmp.eq.s32.totalorder %s16, 0
      %p71 = por %p69, %p70
      %p72 = scmp.ne.s32.totalorder %s61, %s64
      %p73 = scmp.eq.s32.totalorder %s21, 1
      %p74 = por %p72, %p73
      %p75 = scmp.ne.s32.totalorder %s64, %s65
      %p76 = scmp.eq.s32.totalorder %s21, 0
      %p77 = por %p75, %p76
      %p78 = scmp.ne.s32.totalorder %s64, %s65
      %p79 = scmp.eq.s32.totalorder %s22, 1
      %p80 = por %p78, %p79
      %p82 = scmp.ne.s32.totalorder %s65, %s81
      %p83 = scmp.eq.s32.totalorder %s22, 0
      %p84 = por %p82, %p83
      %s85 = ssub.s32 %s24, %s31
      %p86 = scmp.eq.s32.totalorder %s85, 0
      %s88 = sadd.s32 %s87, 1
      %s89 = scalar_select %p86, %s87, %s88
      %p92 = pneg %p86
      %p93 = scmp.eq.s32.totalorder %s16, 1
      %p94 = por %p92, %p93
      %p95 = scmp.ne.s32.totalorder %s87, %s90
      %p96 = scmp.eq.s32.totalorder %s16, 0
      %p97 = por %p95, %p96
      %p98 = scmp.ne.s32.totalorder %s87, %s90
      %p99 = scmp.eq.s32.totalorder %s21, 1
      %p100 = por %p98, %p99
      %p101 = scmp.ne.s32.totalorder %s90, %s91
      %p102 = scmp.eq.s32.totalorder %s21, 0
      %p103 = por %p101, %p102
      %p104 = scmp.ne.s32.totalorder %s90, %s91
      %p105 = scmp.eq.s32.totalorder %s22, 1
      %p106 = por %p104, %p105
      %p108 = scmp.ne.s32.totalorder %s91, %s107
      %p109 = scmp.eq.s32.totalorder %s22, 0
      %p110 = por %p108, %p109
      %s111 = ssub.s32 %s24, %s31
      %p112 = scmp.eq.s32.totalorder %s111, 0
      %s114 = sadd.s32 %s113, 1
      %s115 = scalar_select %p112, %s113, %s114
      %p118 = pneg %p112
      %p119 = scmp.eq.s32.totalorder %s16, 1
      %p120 = por %p118, %p119
      %p121 = scmp.ne.s32.totalorder %s113, %s116
      %p122 = scmp.eq.s32.totalorder %s16, 0
      %p123 = por %p121, %p122
      %p124 = scmp.ne.s32.totalorder %s113, %s116
      %p125 = scmp.eq.s32.totalorder %s21, 1
      %p126 = por %p124, %p125
      %p127 = scmp.ne.s32.totalorder %s116, %s117
      %p128 = scmp.eq.s32.totalorder %s21, 0
      %p129 = por %p127, %p128
      %p130 = scmp.ne.s32.totalorder %s116, %s117
      %p131 = scmp.eq.s32.totalorder %s22, 1
      %p132 = por %p130, %p131
      %p134 = scmp.ne.s32.totalorder %s117, %s133
      %p135 = scmp.eq.s32.totalorder %s22, 0
      %p136 = por %p134, %p135
      %s137 = ssub.s32 %s23, %s35
      %s138 = ssub.s32 %s24, %s31
      %s139 = sor.u32 %s137, %s138
      %p140 = scmp.eq.s32.totalorder %s139, 0
      %s142 = sadd.s32 %s141, 1
      %s143 = scalar_select %p140, %s141, %s142
      %p146 = pneg %p140
      %p147 = scmp.eq.s32.totalorder %s16, 1
      %p148 = por %p146, %p147
      %p149 = scmp.ne.s32.totalorder %s141, %s144
      %p150 = scmp.eq.s32.totalorder %s16, 0
      %p151 = por %p149, %p150
      %p152 = scmp.ne.s32.totalorder %s141, %s144
      %p153 = scmp.eq.s32.totalorder %s21, 1
      %p154 = por %p152, %p153
      %p155 = scmp.ne.s32.totalorder %s144, %s145
      %p156 = scmp.eq.s32.totalorder %s21, 0
      %p157 = por %p155, %p156
      %p158 = scmp.ne.s32.totalorder %s144, %s145
      %p159 = scmp.eq.s32.totalorder %s22, 1
      %p160 = por %p158, %p159
      %p162 = scmp.ne.s32.totalorder %s145, %s161
      %p163 = scmp.eq.s32.totalorder %s22, 0
      %p164 = por %p162, %p163
      %p165 = scmp.le.s32.totalorder 1, %s16
      %p166 = scmp.lt.s32.totalorder %s16, 3
      %p167 = pnand %p165, %p166
      %p168 = pneg %p167
      // Predicated region
      $region9: #{tpu_custom_call.1} parent=5 // pred_check
        _
      $region10: #{tpu_custom_call.1} parent=5 // pred_check_branch
        %170 = sbr.rel (%p167) target = $region12
      $region11: #{tpu_custom_call.1} parent=5 // pred_region
        %s171 = ssub.s32 %s16, 1
        // Predicated region
        $region13: #{tpu_custom_call.1} parent=11 // pred_check
          %p172 = pneg %p49
        $region14: #{tpu_custom_call.1} parent=11 // pred_check_branch
          %174 = sbr.rel (%p172) target = $region16
        $region15: #{tpu_custom_call.1} parent=11 // pred_region
          _
        $region16: #{tpu_custom_call.1} parent=11 // pred_fallthru
          _
        // Predicated region
        $region17: #{tpu_custom_call.1} parent=11 // pred_check
          %p175 = pneg %p103
        $region18: #{tpu_custom_call.1} parent=11 // pred_check_branch
          %177 = sbr.rel (%p175) target = $region20
        $region19: #{tpu_custom_call.1} parent=11 // pred_region
          %p178 = scmp.lt.s32.totalorder %s26, 0
          %s179 = scalar_select %p178, %s26, 0
          %s180 = smul.addr %s179, 4
          %s181 = scalar_lea.vmem %s2, %s180
        $region20: #{tpu_custom_call.1} parent=11 // pred_fallthru
          _
        // Predicated region
        $region21: #{tpu_custom_call.1} parent=11 // pred_check
          %p182 = pneg %p129
        $region22: #{tpu_custom_call.1} parent=11 // pred_check_branch
          %184 = sbr.rel (%p182) target = $region24
        $region23: #{tpu_custom_call.1} parent=11 // pred_region
          %p185 = scmp.lt.s32.totalorder %s26, 0
          %s186 = scalar_select %p185, %s26, 0
          %s187 = smul.addr %s186, 4
          %s188 = scalar_lea.vmem %s3, %s187
        $region24: #{tpu_custom_call.1} parent=11 // pred_fallthru
          _
      $region12: #{tpu_custom_call.1} parent=5 // pred_fallthru
        _
      %p189 = scmp.lt.s32.totalorder %s16, 2
      // Predicated region
      $region25: #{tpu_custom_call.1} parent=5 // pred_check
        %p190 = pneg %p189
      $region26: #{tpu_custom_call.1} parent=5 // pred_check_branch
        %192 = sbr.rel (%p190) target = $region28
      $region27: #{tpu_custom_call.1} parent=5 // pred_region
        // Predicated region
        $region29: #{tpu_custom_call.1} parent=27 // pred_check
          %p193 = pneg %p71
        $region30: #{tpu_custom_call.1} parent=27 // pred_check_branch
          %195 = sbr.rel (%p193) target = $region32
        $region31: #{tpu_custom_call.1} parent=27 // pred_region
          %s196 = sand.u32 %s61, 1
          %s197 = scalar_lea.sflag [#allocation3], %s196
          %s198 = sand.u32 %s61, 1
          %s199 = smul.addr %s198, 8
          %s200 = scalar_lea.vmem [#allocation2], %s199
          %s202 = ssub.s32 128, 128
          %203 = vsyncadd %s197, %s202
          %s204 = smul.addr %s24, 2
          %s205 = smul.addr %s23, 2
          %s206 = sadd.s32 %s204, %s205
          %s207 = smul.addr %s206, 64
          %s208 = scalar_lea.hbm %s1, %s207
          %s210 = sshll.u32 %s200, 4
          %s211 = int_to_ptr.vmem [resolvable:$true] %s210
          %213 = dma.hbm_to_vmem [thread:$0]  %s208, 128, %s211, %s197
        $region32: #{tpu_custom_call.1} parent=27 // pred_fallthru
          _
      $region28: #{tpu_custom_call.1} parent=5 // pred_fallthru
        _
      %p214 = scmp.le.s32.totalorder 1, %s16
      %p215 = scmp.lt.s32.totalorder %s16, 3
      %p216 = pnand %p214, %p215
      %p217 = pneg %p216
      // Predicated region
      $region33: #{tpu_custom_call.1} parent=5 // pred_check
        _
      $region34: #{tpu_custom_call.1} parent=5 // pred_check_branch
        %219 = sbr.rel (%p216) target = $region36
      $region35: #{tpu_custom_call.1} parent=5 // pred_region
        %s220 = ssub.s32 %s16, 1
        %s221 = sand.u32 %s64, 1
        %s222 = scalar_lea.sflag [#allocation3], %s221
        %s223 = sand.u32 %s64, 1
        %s224 = smul.addr %s223, 8
        %s225 = scalar_lea.vmem [#allocation2], %s224
        // Predicated region
        $region37: #{tpu_custom_call.1} parent=35 // pred_check
          %p226 = pneg %p77
        $region38: #{tpu_custom_call.1} parent=35 // pred_check_branch
          %228 = sbr.rel (%p226) target = $region40
        $region39: #{tpu_custom_call.1} parent=35 // pred_region
          %229 = dma.done %s222, 128
        $region40: #{tpu_custom_call.1} parent=35 // pred_fallthru
          _
        %p230 = pneg %p49
        %p231 = pneg %p46
        %s232 = sand.u32 %s64, 1
        %s233 = scalar_lea.sflag [#allocation3], %s232
        %s234 = sand.u32 %s64, 1
        %s235 = smul.addr %s234, 8
        %s236 = scalar_lea.vmem [#allocation2], %s235
        %p237 = pneg %p77
        %p238 = pneg %p74
        %p239 = scmp.lt.s32.totalorder %s26, 0
        %s240 = scalar_select %p239, %s26, 0
        %s241 = smul.addr %s240, 4
        %s242 = scalar_lea.vmem %s2, %s241
        %p243 = pneg %p103
        %p244 = pneg %p100
        %p245 = scmp.lt.s32.totalorder %s26, 0
        %s246 = scalar_select %p245, %s26, 0
        %s247 = smul.addr %s246, 4
        %s248 = scalar_lea.vmem %s3, %s247
        %p249 = pneg %p129
        %p250 = pneg %p126
        %p251 = pneg %p157
        %p252 = pneg %p154
        %s253 = sand.u32 %s144, 1
        %s254 = scalar_lea.sflag [#allocation4], %s253
        %s255 = sand.u32 %s144, 1
        %s256 = smul.addr %s255, 8
        %s257 = scalar_lea.vmem [#allocation5], %s256
        %p258 = scmp.lt.s32.totalorder %s26, 0
        %s259 = scalar_select %p258, %s26, 0
        %s260 = smul.addr %s259, 4
        %s261 = scalar_lea.vmem %s2, %s260
        %p262 = scmp.lt.s32.totalorder %s26, 0
        %s263 = scalar_select %p262, %s26, 0
        %s264 = smul.addr %s263, 4
        %s265 = scalar_lea.vmem %s3, %s264
        %v266 = vld [vmem:[%s225] sm:$0xff]
        %v267 = vld [vmem:[%s261] sm:$0xf]
        %v268 = vld [vmem:[%s265] sm:$0xf]
        %v269 = vld [vmem:[%s0] ss:$2 sm:$0x3]
        %v270 = vlaneseq
        %v271 = vshrl.u32 %v270, 7
        %v272 = vsub.s32 0, %v271
        %v273 = vrot.slane %v269, %v272
        %v274 = vlaneseq
        %v275 = vshrl.u32 %v274, 7
        %v276 = vsub.s32 1, %v275
        %v277 = vrot.slane %v269, %v276
        %s278 = scalar_lea.vmem %s0, 1
        %v279 = vld [vmem:[%s278] ss:$2 sm:$0x3]
        %v280 = vlaneseq
        %v281 = vshrl.u32 %v280, 7
        %v282 = vsub.s32 0, %v281
        %v283 = vrot.slane %v279, %v282
        %v284 = vlaneseq
        %v285 = vshrl.u32 %v284, 7
        %v286 = vsub.s32 1, %v285
        %v287 = vrot.slane %v279, %v286
        %vm288 = vcmp.ge.s32.totalorder %v273, 1
        %vm289 = vcmp.ge.s32.totalorder %v277, 1
        %vm290 = vcmp.le.s32.totalorder %v273, 14
        %vm291 = vcmp.le.s32.totalorder %v277, 14
        %vm292 = vcmp.ge.s32.totalorder %v283, 1
        %vm293 = vcmp.ge.s32.totalorder %v287, 1
        %vm294 = vcmp.le.s32.totalorder %v283, 14
        %vm295 = vcmp.le.s32.totalorder %v287, 14
        %v297 = vcombine.high %v266, %v266
        %299 = vrot.lane.b32.xlu0 %v266, 16
        %v300 = vpop.permute.xlu0 %299
        %301 = vrot.lane.b32.xlu0 %v297, 16
        %v302 = vpop.permute.xlu0 %301
        %v303 = vlaneseq
        %v304 = vand.u32 %v303, 127
        %vm305 = vcmp.lt.s32.totalorder %v304, 16
        %v306 = vsel %vm305, %v300, %v302
        %v307 = vsel %vm305, %v302, %v300
        %v308 = vsel %vm288, %v307, 0.0
        %v309 = vsel %vm289, %v306, 0.0
        %310 = vrot.lane.b32.xlu0 %v266, 112
        %v311 = vpop.permute.xlu0 %310
        %312 = vrot.lane.b32.xlu0 %v297, 112
        %v313 = vpop.permute.xlu0 %312
        %vm314 = vcmp.lt.s32.totalorder %v304, 112
        %v315 = vsel %vm314, %v311, %v313
        %v316 = vsel %vm314, %v313, %v311
        %v317 = vsel %vm290, %v315, 0.0
        %v318 = vsel %vm291, %v316, 0.0
        %320 = vset.pattern.permute.xlu0 0
        %321 = vperm.xlu0 %320, %v268
        %v322 = vpop.permute.xlu0 %321
        %324 = vrot.lane.b32.xlu0 %v308, 1
        %v325 = vpop.permute.xlu0 %324
        %326 = vrot.lane.b32.xlu0 %v309, 1
        %v327 = vpop.permute.xlu0 %326
        %vm328 = vcmp.lt.s32.totalorder %v304, 1
        %v329 = vsel %vm328, %v325, %v327
        %v330 = vsel %vm328, %v327, %v325
        %v331 = vsel %vm292, %v330, 0.0
        %v332 = vsel %vm293, %v329, 0.0
        %334 = vset.pattern.permute.xlu0 0
        %335 = vperm.xlu0 %334, %v267
        %v336 = vpop.permute.xlu0 %335
        %v338 = vmul.f32 %v331, %v336
        %v339 = vmul.f32 %v332, %v336
        %v340 = vadd.f32 %v322, %v338
        %v341 = vadd.f32 %v322, %v339
        %342 = vset.pattern.permute.xlu0 1
        %343 = vperm.xlu0 %342, %v267
        %v344 = vpop.permute.xlu0 %343
        %v346 = vmul.f32 %v308, %v344
        %v347 = vmul.f32 %v309, %v344
        %v348 = vadd.f32 %v340, %v346
        %v349 = vadd.f32 %v341, %v347
        %350 = vrot.lane.b32.xlu0 %v308, 127
        %v351 = vpop.permute.xlu0 %350
        %352 = vrot.lane.b32.xlu0 %v309, 127
        %v353 = vpop.permute.xlu0 %352
        %vm354 = vcmp.lt.s32.totalorder %v304, 127
        %v355 = vsel %vm354, %v351, %v353
        %v356 = vsel %vm354, %v353, %v351
        %v357 = vsel %vm294, %v355, 0.0
        %v358 = vsel %vm295, %v356, 0.0
        %359 = vset.pattern.permute.xlu0 2
        %360 = vperm.xlu0 %359, %v267
        %v361 = vpop.permute.xlu0 %360
        %v363 = vmul.f32 %v357, %v361
        %v364 = vmul.f32 %v358, %v361
        %v365 = vadd.f32 %v348, %v363
        %v366 = vadd.f32 %v349, %v364
        %367 = vrot.lane.b32.xlu0 %v266, 1
        %v368 = vpop.permute.xlu0 %367
        %369 = vrot.lane.b32.xlu0 %v297, 1
        %v370 = vpop.permute.xlu0 %369
        %v371 = vsel %vm328, %v368, %v370
        %v372 = vsel %vm328, %v370, %v368
        %v373 = vsel %vm292, %v372, 0.0
        %v374 = vsel %vm293, %v371, 0.0
        %375 = vset.pattern.permute.xlu0 3
        %376 = vperm.xlu0 %375, %v267
        %v377 = vpop.permute.xlu0 %376
        %v379 = vmul.f32 %v373, %v377
        %v380 = vmul.f32 %v374, %v377
        %v381 = vadd.f32 %v365, %v379
        %v382 = vadd.f32 %v366, %v380
        %383 = vset.pattern.permute.xlu0 4
        %384 = vperm.xlu0 %383, %v267
        %v385 = vpop.permute.xlu0 %384
        %v387 = vunpack.c.l.s4 839922192
        %v388 = vunpack.c.0.s8 %v387
        %v389 = vlaneseq
        %v390 = vshrl.u32 %v389, 7
        %v391 = vsub.s32 %v388, %v390
        %v392 = vrot.slane %v385, %v391
        %v394 = vmul.f32 %v266, %v392
        %v396 = vcombine.high %v394, %v394
        %v398 = vadd.f32 %v381, %v394
        %v399 = vadd.f32 %v382, %v396
        %400 = vrot.lane.b32.xlu0 %v266, 127
        %v401 = vpop.permute.xlu0 %400
        %402 = vrot.lane.b32.xlu0 %v297, 127
        %v403 = vpop.permute.xlu0 %402
        %v404 = vsel %vm354, %v401, %v403
        %v405 = vsel %vm354, %v403, %v401
        %v406 = vsel %vm294, %v404, 0.0
        %v407 = vsel %vm295, %v405, 0.0
        %408 = vset.pattern.permute.xlu0 5
        %409 = vperm.xlu0 %408, %v267
        %v410 = vpop.permute.xlu0 %409
        %v412 = vmul.f32 %v406, %v410
        %v413 = vmul.f32 %v407, %v410
        %v414 = vadd.f32 %v398, %v412
        %v415 = vadd.f32 %v399, %v413
        %416 = vrot.lane.b32.xlu0 %v317, 1
        %v417 = vpop.permute.xlu0 %416
        %418 = vrot.lane.b32.xlu0 %v318, 1
        %v419 = vpop.permute.xlu0 %418
        %v420 = vsel %vm328, %v417, %v419
        %v421 = vsel %vm328, %v419, %v417
        %v422 = vsel %vm292, %v421, 0.0
        %v423 = vsel %vm293, %v420, 0.0
        %424 = vset.pattern.permute.xlu0 6
        %425 = vperm.xlu0 %424, %v267
        %v426 = vpop.permute.xlu0 %425
        %v428 = vmul.f32 %v422, %v426
        %v429 = vmul.f32 %v423, %v426
        %v430 = vadd.f32 %v414, %v428
        %v431 = vadd.f32 %v415, %v429
        %432 = vset.pattern.permute.xlu0 7
        %433 = vperm.xlu0 %432, %v267
        %v434 = vpop.permute.xlu0 %433
        %v436 = vmul.f32 %v317, %v434
        %v437 = vmul.f32 %v318, %v434
        %v438 = vadd.f32 %v430, %v436
        %v439 = vadd.f32 %v431, %v437
        %440 = vrot.lane.b32.xlu0 %v317, 127
        %v441 = vpop.permute.xlu0 %440
        %442 = vrot.lane.b32.xlu0 %v318, 127
        %v443 = vpop.permute.xlu0 %442
        %v444 = vsel %vm354, %v441, %v443
        %v445 = vsel %vm354, %v443, %v441
        %v446 = vsel %vm294, %v444, 0.0
        %v447 = vsel %vm295, %v445, 0.0
        %448 = vset.pattern.permute.xlu0 8
        %449 = vperm.xlu0 %448, %v267
        %v450 = vpop.permute.xlu0 %449
        %v452 = vmul.f32 %v446, %v450
        %v453 = vmul.f32 %v447, %v450
        %v454 = vadd.f32 %v438, %v452
        %v455 = vadd.f32 %v439, %v453
        %v458 = vcombine.low %v454, %v455
        %460 = vst [vmem:[%s257] sm:$0xff] %v458
        %s461 = sand.u32 %s144, 1
        %s462 = scalar_lea.sflag [#allocation4], %s461
        %s463 = sand.u32 %s144, 1
        %s464 = smul.addr %s463, 8
        %s465 = scalar_lea.vmem [#allocation5], %s464
        // Predicated region
        $region41: #{tpu_custom_call.1} parent=35 // pred_check
          %p466 = pneg %p154
        $region42: #{tpu_custom_call.1} parent=35 // pred_check_branch
          %468 = sbr.rel (%p466) target = $region44
        $region43: #{tpu_custom_call.1} parent=35 // pred_region
          %s470 = ssub.s32 128, 128
          %471 = vsyncadd %s462, %s470
          %s472 = smul.addr %s26, 2
          %s473 = smul.addr %s25, 2
          %s474 = sadd.s32 %s472, %s473
          %s475 = smul.addr %s474, 64
          %s476 = scalar_lea.hbm %s4, %s475
          %s478 = sshll.u32 %s465, 4
          %s479 = int_to_ptr.vmem [resolvable:$true] %s478
          %481 = dma.vmem_to_hbm [thread:$0]  %s479, 128, %s476, %s462
        $region44: #{tpu_custom_call.1} parent=35 // pred_fallthru
          _
      $region36: #{tpu_custom_call.1} parent=5 // pred_fallthru
        _
      %p482 = scmp.le.s32.totalorder 2, %s16
      // Predicated region
      $region45: #{tpu_custom_call.1} parent=5 // pred_check
        %p483 = pneg %p482
      $region46: #{tpu_custom_call.1} parent=5 // pred_check_branch
        %485 = sbr.rel (%p483) target = $region48
      $region47: #{tpu_custom_call.1} parent=5 // pred_region
        %s486 = ssub.s32 %s16, 2
        // Predicated region
        $region49: #{tpu_custom_call.1} parent=47 // pred_check
          %p487 = pneg %p160
        $region50: #{tpu_custom_call.1} parent=47 // pred_check_branch
          %489 = sbr.rel (%p487) target = $region52
        $region51: #{tpu_custom_call.1} parent=47 // pred_region
          %s490 = sand.u32 %s145, 1
          %s491 = scalar_lea.sflag [#allocation4], %s490
          %s492 = sand.u32 %s145, 1
          %s493 = smul.addr %s492, 8
          %s494 = scalar_lea.vmem [#allocation5], %s493
          %495 = dma.done %s491, 128
        $region52: #{tpu_custom_call.1} parent=47 // pred_fallthru
          _
      $region48: #{tpu_custom_call.1} parent=5 // pred_fallthru
        _
    $region6: #{tpu_custom_call.1} parent=1 // loop_footer
      %s20 = sadd.s32 1, %s16
    $region7: #{tpu_custom_call.1} parent=1 // loop_footer_branch
      %15 = sbr.rel target = $region3
    $region8: #{tpu_custom_call.1} parent=1 // loop_exit
      _
    %496 = vsyncpa [#allocation3], 1
    %s497 = scalar_lea.sflag [#allocation3], 1
    %498 = vsyncpa %s497, 1
    %499 = vsyncpa [#allocation4], 1
    %s500 = scalar_lea.sflag [#allocation4], 1
    %501 = vsyncpa %s500, 1

</llo_original>
